<compile_context>
chip_gen: v6e
topology: v6e:2x2x1
jax: 0.10.0
libtpu: 0.0.40
codegen_flags: <defaults>
</compile_context>

<pallas_src>
import functools
import math

import jax
import jax.numpy as jnp
from jax.experimental import pallas as pl
from jax.experimental.pallas import tpu as pltpu


def _round_up(x, m):
    return ((x + m - 1) // m) * m


def _ls_kl_kernel(output_ref, target_ref, loss_ref, acc_sum_ref, acc_tgt_ref, *,
                  confidence, smoothing_value, conf_xlogy, smooth_xlogy,
                  ignore_index, zero_col, n_rows, n_cols, lane_w):
    i = pl.program_id(0)            # batch tile  (parallel)
    j = pl.program_id(1)            # vocab tile  (reduction)

    tb, tv = output_ref.shape
    num_chunks = tv // lane_w

    @pl.when(j == 0)
    def _init():
        acc_sum_ref[...] = jnp.zeros_like(acc_sum_ref)
        acc_tgt_ref[...] = jnp.zeros_like(acc_tgt_ref)

    # Hoisted per-tile values (invariant across the chunk loop).
    tgt = target_ref[...]                                        # (tb, 1) int32
    tgt_b = jnp.broadcast_to(tgt, (tb, lane_w))                  # hoisted lane-bcast
    lane = jax.lax.broadcasted_iota(jnp.int32, (1, lane_w), 1)   # (1, lane_w)
    col0 = j * tv

    # Stream the tile in lane_w-wide chunks; keep the running sums in vregs and
    # touch the VMEM scratch accumulators only once per grid step.
    run_sum = jnp.zeros((tb, lane_w), jnp.float32)
    run_tgt = jnp.zeros((tb, lane_w), jnp.float32)
    for k in range(num_chunks):
        col = lane + (col0 + k * lane_w)                         # (1, lane_w)
        col_ok = (col < n_cols) & (col != zero_col)              # (1, lane_w)
        logp = output_ref[:, k * lane_w:(k + 1) * lane_w].astype(jnp.float32)
        is_tgt = col == tgt_b                                    # (tb, lane_w)
        # Selects (not 0/1 multiplies) so -inf log-probs in masked columns
        # (padded tail columns, the zeroed ignore_index column) never reach a
        # multiply and cannot turn into NaN.
        run_sum = run_sum + jnp.where(col_ok, logp, 0.0)
        run_tgt = run_tgt + jnp.where(is_tgt, logp, 0.0)
    acc_sum_ref[...] += run_sum
    acc_tgt_ref[...] += run_tgt

    @pl.when(j == pl.num_programs(1) - 1)
    def _finalize():
        # One cross-lane reduce per accumulator, then the constant-folded
        # per-row affine combination (no transcendentals, no per-element work).
        row_sum = jnp.sum(acc_sum_ref[...], axis=1, keepdims=True)   # (tb, 1)
        tgt_val = jnp.sum(acc_tgt_ref[...], axis=1, keepdims=True)   # (tb, 1)
        t = target_ref[...]
        row = jax.lax.broadcasted_iota(jnp.int32, (tb, 1), 0) + i * tb
        active = (row < n_rows) & (t != ignore_index)
        is_zc = t == zero_col        # target hits the zeroed column (neg. ignore_index)
        c0 = conf_xlogy + (n_cols - 2) * smooth_xlogy
        cst = jnp.where(is_zc, jnp.float32(c0 + smooth_xlogy), jnp.float32(c0))
        coef = jnp.where(is_zc, jnp.float32(-confidence),
                         jnp.float32(smoothing_value - confidence))
        row_loss = cst - jnp.float32(smoothing_value) * row_sum + coef * tgt_val
        row_loss = jnp.where(active, row_loss, jnp.float32(0.0))
        loss_ref[...] = jnp.sum(row_loss).reshape(1, 1, 1)


def label_smoothing_loss(output, target, *, label_smoothing, ignore_index,
                         block_b=64, block_v=8192):
    """output: (B, V) float log-probs; target: (B,) int. Returns scalar KL sum."""
    B, V = output.shape
    confidence = 1.0 - float(label_smoothing)
    smoothing_value = float(label_smoothing) / (V - 2)
    conf_xlogy = confidence * math.log(confidence) if confidence > 0.0 else 0.0
    smooth_xlogy = (smoothing_value * math.log(smoothing_value)
                    if smoothing_value > 0.0 else 0.0)
    # PyTorch `one_hot[ignore_index] = 0` follows negative-index semantics.
    zero_col = ignore_index if ignore_index >= 0 else ignore_index + V

    # Batch tile: multiple of 8 (or full padded dim); keep >= 2 batch tiles
    # whenever B > 8 so the "parallel" axis can shard across both v7x cores.
    b_pad = _round_up(B, 8)
    tb = min(_round_up(max(block_b, 8), 8), b_pad)
    if b_pad > 8 and pl.cdiv(B, tb) < 2:
        tb = max(8, _round_up(-(-B // 2), 8))
    nb = pl.cdiv(B, tb)

    # Vocab tile: full dim if it fits (always legal), else a 128-aligned block.
    if V <= block_v:
        tv = V
    else:
        tv = max(128, (block_v // 128) * 128)
    nv = pl.cdiv(V, tv)
    lane_w = 128 if tv % 128 == 0 else tv

    target2d = target.reshape(B, 1).astype(jnp.int32)

    kernel = functools.partial(
        _ls_kl_kernel,
        confidence=confidence, smoothing_value=smoothing_value,
        conf_xlogy=conf_xlogy, smooth_xlogy=smooth_xlogy,
        ignore_index=int(ignore_index), zero_col=int(zero_col),
        n_rows=B, n_cols=V, lane_w=lane_w)

    # Scoped VMEM: double-buffered input block + scratch, floored at 32 MiB
    # (raises v5e's 16 MiB default), capped at 64 MiB (v7x physical VMEM).
    in_block_bytes = tb * tv * output.dtype.itemsize
    vmem_limit = int(min(max(32 << 20, 3 * in_block_bytes + (4 << 20)), 64 << 20))

    partials = pl.pallas_call(
        kernel,
        out_shape=jax.ShapeDtypeStruct((nb, 1, 1), jnp.float32),
        grid_spec=pltpu.PrefetchScalarGridSpec(
            num_scalar_prefetch=0,
            grid=(nb, nv),
            in_specs=[
                pl.BlockSpec((tb, tv), lambda i, j: (i, j)),   # log-prob tile
                pl.BlockSpec((tb, 1), lambda i, j: (i, 0)),    # target column
            ],
            out_specs=pl.BlockSpec((1, 1, 1), lambda i, j: (i, 0, 0)),
            scratch_shapes=[pltpu.VMEM((tb, lane_w), jnp.float32),
                            pltpu.VMEM((tb, lane_w), jnp.float32)],
        ),
        compiler_params=pltpu.CompilerParams(
            dimension_semantics=("parallel", "arbitrary"),
            vmem_limit_bytes=vmem_limit),
    )(output, target2d)
    return jnp.sum(partials)


def _reference(output, target, label_smoothing, ignore_index):
    B, V = output.shape
    confidence = 1.0 - label_smoothing
    smoothing_value = label_smoothing / (V - 2)
    zero_col = ignore_index if ignore_index >= 0 else ignore_index + V
    one_hot = jnp.full((V,), smoothing_value, dtype=jnp.float32)
    one_hot = one_hot.at[zero_col].set(0.0)
    col = jnp.arange(V)[None, :]
    tgt = target[:, None]
    p = jnp.where(col == tgt, jnp.float32(confidence), one_hot[None, :])
    p = jnp.where(tgt == ignore_index, 0.0, p)
    kl = jnp.where(p > 0, p * (jnp.log(p) - output.astype(jnp.float32)), 0.0)
    return jnp.sum(kl)


if __name__ == "__main__":
    # Module hyperparameters (deterministic, in-script).
    label_smoothing = 0.1
    tgt_vocab_size = 384
    ignore_index = 1                      # padding index
    B = 20                                # deliberately not a multiple of 8

    key = jax.random.PRNGKey(0)
    k1, k2, k3 = jax.random.split(key, 3)
    logits = jax.random.normal(k1, (B, tgt_vocab_size), dtype=jnp.float32)
    output = jax.nn.log_softmax(logits, axis=-1)
    target = jax.random.randint(k2, (B,), 0, tgt_vocab_size, dtype=jnp.int32)
    pad_mask = jax.random.bernoulli(k3, 0.25, (B,))
    target = jnp.where(pad_mask, jnp.int32(ignore_index), target)

    ref = _reference(output, target, label_smoothing, ignore_index)

    # Default config: exercises the megacore split (B=20 -> two 16-row tiles)
    # with the full vocab in one tile (3 lane chunks of 128).
    loss_big = label_smoothing_loss(output, target,
                                    label_smoothing=label_smoothing,
                                    ignore_index=ignore_index)
    # Small-block config: exercises the 2-D grid, the vocab reduction across
    # grid steps (scratch accumulators) and the batch-tail masking path.
    loss_tiled = label_smoothing_loss(output, target,
                                      label_smoothing=label_smoothing,
                                      ignore_index=ignore_index,
                                      block_b=8, block_v=128)
    loss_big, loss_tiled = jax.block_until_ready((loss_big, loss_tiled))

    assert jnp.allclose(loss_big, ref, rtol=1e-4, atol=1e-4), (loss_big, ref)
    assert jnp.allclose(loss_tiled, ref, rtol=1e-4, atol=1e-4), (loss_tiled, ref)
    print("KERNEL_OK")
</pallas_src>

<mosaic_0001>
module attributes {stable_mosaic.version = 11 : i64} {
  func.func @_ls_kl_kernel(%arg0: i32, %arg1: i32, %arg2: memref<16x384xf32, #tpu.memory_space<vmem>>, %arg3: memref<16x1xi32, #tpu.memory_space<vmem>>, %arg4: memref<1x1x1xf32, #tpu.memory_space<vmem>>, %arg5: memref<16x128xf32, #tpu.memory_space<vmem>>, %arg6: memref<16x128xf32, #tpu.memory_space<vmem>>) attributes {dimension_semantics = [#tpu.dimension_semantics<parallel>, #tpu.dimension_semantics<arbitrary>], iteration_bounds = array<i64: 2, 1>, scalar_prefetch = 0 : i64, scratch_operands = 2 : i64, tpu.core_type = #tpu.core_type<tc>, window_params = [{transform_indices = @transform_0, window_bounds = array<i64: 16, 384>}, {transform_indices = @transform_1, window_bounds = array<i64: 16, 1>}, {transform_indices = @transform_2, window_bounds = array<i64: 1, 1, 1>}]} {
    %c0_i32 = arith.constant 0 : i32
    %0 = arith.cmpi eq, %arg1, %c0_i32 : i32
    %1 = arith.extui %0 : i1 to i32
    %c0_i32_0 = arith.constant 0 : i32
    %2 = arith.cmpi ne, %1, %c0_i32_0 : i32
    scf.if %2 {
      %cst_29 = arith.constant 0.000000e+00 : f32
      %76 = vector.broadcast %cst_29 : f32 to vector<16x128xf32>
      %c0_30 = arith.constant 0 : index
      %c0_31 = arith.constant 0 : index
      %77 = vector.load %arg5[%c0_30, %c0_31] : memref<16x128xf32, #tpu.memory_space<vmem>>, vector<16x128xf32>
      tpu.vector_store %arg5[%c0_30, %c0_31], %76 {strides = array<i32>} : memref<16x128xf32, #tpu.memory_space<vmem>>, vector<16x128xf32>,
      %cst_32 = arith.constant 0.000000e+00 : f32
      %78 = vector.broadcast %cst_32 : f32 to vector<16x128xf32>
      %c0_33 = arith.constant 0 : index
      %c0_34 = arith.constant 0 : index
      %79 = vector.load %arg6[%c0_33, %c0_34] : memref<16x128xf32, #tpu.memory_space<vmem>>, vector<16x128xf32>
      tpu.vector_store %arg6[%c0_33, %c0_34], %78 {strides = array<i32>} : memref<16x128xf32, #tpu.memory_space<vmem>>, vector<16x128xf32>,
    } else {
    }
    %c0 = arith.constant 0 : index
    %c0_1 = arith.constant 0 : index
    %3 = vector.load %arg3[%c0, %c0_1] : memref<16x1xi32, #tpu.memory_space<vmem>>, vector<16x1xi32>
    %4 = vector.shape_cast %3 : vector<16x1xi32> to vector<16x1xi32>
    %5 = vector.broadcast %4 : vector<16x1xi32> to vector<16x128xi32>
    %6 = tpu.iota {dimensions = array<i32: 1>} : vector<1x128xi32>
    %c384_i32 = arith.constant 384 : i32
    %7 = arith.muli %arg1, %c384_i32 : i32
    %cst = arith.constant 0.000000e+00 : f32
    %8 = vector.broadcast %cst : f32 to vector<16x128xf32>
    %cst_2 = arith.constant 0.000000e+00 : f32
    %9 = vector.broadcast %cst_2 : f32 to vector<16x128xf32>
    %c0_i32_3 = arith.constant 0 : i32
    %10 = arith.addi %7, %c0_i32_3 : i32
    %11 = vector.broadcast %10 : i32 to vector<1x128xi32>
    %12 = arith.addi %6, %11 : vector<1x128xi32>
    %c384_i32_4 = arith.constant 384 : i32
    %13 = vector.broadcast %c384_i32_4 : i32 to vector<1x128xi32>
    %14 = arith.cmpi slt, %12, %13 : vector<1x128xi32>
    %c1_i32 = arith.constant 1 : i32
    %15 = vector.broadcast %c1_i32 : i32 to vector<1x128xi32>
    %16 = arith.cmpi ne, %12, %15 : vector<1x128xi32>
    %17 = arith.andi %14, %16 : vector<1x128xi1>
    %c0_5 = arith.constant 0 : index
    %c0_6 = arith.constant 0 : index
    %18 = vector.load %arg2[%c0_5, %c0_6] : memref<16x384xf32, #tpu.memory_space<vmem>>, vector<16x128xf32>
    %19 = vector.broadcast %12 : vector<1x128xi32> to vector<16x128xi32>
    %20 = arith.cmpi eq, %19, %5 : vector<16x128xi32>
    %cst_7 = arith.constant 0.000000e+00 : f32
    %21 = vector.shape_cast %17 : vector<1x128xi1> to vector<1x128xi1>
    %22 = vector.broadcast %21 : vector<1x128xi1> to vector<16x128xi1>
    %23 = vector.broadcast %cst_7 : f32 to vector<16x128xf32>
    %24 = arith.select %22, %18, %23 : vector<16x128xi1>, vector<16x128xf32>
    %25 = arith.addf %8, %24 : vector<16x128xf32>
    %cst_8 = arith.constant 0.000000e+00 : f32
    %26 = vector.broadcast %cst_8 : f32 to vector<16x128xf32>
    %27 = arith.select %20, %18, %26 : vector<16x128xi1>, vector<16x128xf32>
    %28 = arith.addf %9, %27 : vector<16x128xf32>
    %c128_i32 = arith.constant 128 : i32
    %29 = arith.addi %7, %c128_i32 : i32
    %30 = vector.broadcast %29 : i32 to vector<1x128xi32>
    %31 = arith.addi %6, %30 : vector<1x128xi32>
    %c384_i32_9 = arith.constant 384 : i32
    %32 = vector.broadcast %c384_i32_9 : i32 to vector<1x128xi32>
    %33 = arith.cmpi slt, %31, %32 : vector<1x128xi32>
    %c1_i32_10 = arith.constant 1 : i32
    %34 = vector.broadcast %c1_i32_10 : i32 to vector<1x128xi32>
    %35 = arith.cmpi ne, %31, %34 : vector<1x128xi32>
    %36 = arith.andi %33, %35 : vector<1x128xi1>
    %c0_11 = arith.constant 0 : index
    %c128 = arith.constant 128 : index
    %37 = vector.load %arg2[%c0_11, %c128] : memref<16x384xf32, #tpu.memory_space<vmem>>, vector<16x128xf32>
    %38 = vector.broadcast %31 : vector<1x128xi32> to vector<16x128xi32>
    %39 = arith.cmpi eq, %38, %5 : vector<16x128xi32>
    %cst_12 = arith.constant 0.000000e+00 : f32
    %40 = vector.shape_cast %36 : vector<1x128xi1> to vector<1x128xi1>
    %41 = vector.broadcast %40 : vector<1x128xi1> to vector<16x128xi1>
    %42 = vector.broadcast %cst_12 : f32 to vector<16x128xf32>
    %43 = arith.select %41, %37, %42 : vector<16x128xi1>, vector<16x128xf32>
    %44 = arith.addf %25, %43 : vector<16x128xf32>
    %cst_13 = arith.constant 0.000000e+00 : f32
    %45 = vector.broadcast %cst_13 : f32 to vector<16x128xf32>
    %46 = arith.select %39, %37, %45 : vector<16x128xi1>, vector<16x128xf32>
    %47 = arith.addf %28, %46 : vector<16x128xf32>
    %c256_i32 = arith.constant 256 : i32
    %48 = arith.addi %7, %c256_i32 : i32
    %49 = vector.broadcast %48 : i32 to vector<1x128xi32>
    %50 = arith.addi %6, %49 : vector<1x128xi32>
    %c384_i32_14 = arith.constant 384 : i32
    %51 = vector.broadcast %c384_i32_14 : i32 to vector<1x128xi32>
    %52 = arith.cmpi slt, %50, %51 : vector<1x128xi32>
    %c1_i32_15 = arith.constant 1 : i32
    %53 = vector.broadcast %c1_i32_15 : i32 to vector<1x128xi32>
    %54 = arith.cmpi ne, %50, %53 : vector<1x128xi32>
    %55 = arith.andi %52, %54 : vector<1x128xi1>
    %c0_16 = arith.constant 0 : index
    %c256 = arith.constant 256 : index
    %56 = vector.load %arg2[%c0_16, %c256] : memref<16x384xf32, #tpu.memory_space<vmem>>, vector<16x128xf32>
    %57 = vector.broadcast %50 : vector<1x128xi32> to vector<16x128xi32>
    %58 = arith.cmpi eq, %57, %5 : vector<16x128xi32>
    %cst_17 = arith.constant 0.000000e+00 : f32
    %59 = vector.shape_cast %55 : vector<1x128xi1> to vector<1x128xi1>
    %60 = vector.broadcast %59 : vector<1x128xi1> to vector<16x128xi1>
    %61 = vector.broadcast %cst_17 : f32 to vector<16x128xf32>
    %62 = arith.select %60, %56, %61 : vector<16x128xi1>, vector<16x128xf32>
    %63 = arith.addf %44, %62 : vector<16x128xf32>
    %cst_18 = arith.constant 0.000000e+00 : f32
    %64 = vector.broadcast %cst_18 : f32 to vector<16x128xf32>
    %65 = arith.select %58, %56, %64 : vector<16x128xi1>, vector<16x128xf32>
    %66 = arith.addf %47, %65 : vector<16x128xf32>
    %c0_19 = arith.constant 0 : index
    %c0_20 = arith.constant 0 : index
    %67 = vector.load %arg5[%c0_19, %c0_20] : memref<16x128xf32, #tpu.memory_space<vmem>>, vector<16x128xf32>
    %68 = arith.addf %67, %63 : vector<16x128xf32>
    %c0_21 = arith.constant 0 : index
    %c0_22 = arith.constant 0 : index
    %69 = vector.load %arg5[%c0_21, %c0_22] : memref<16x128xf32, #tpu.memory_space<vmem>>, vector<16x128xf32>
    tpu.vector_store %arg5[%c0_21, %c0_22], %68 {strides = array<i32>} : memref<16x128xf32, #tpu.memory_space<vmem>>, vector<16x128xf32>,
    %c0_23 = arith.constant 0 : index
    %c0_24 = arith.constant 0 : index
    %70 = vector.load %arg6[%c0_23, %c0_24] : memref<16x128xf32, #tpu.memory_space<vmem>>, vector<16x128xf32>
    %71 = arith.addf %70, %66 : vector<16x128xf32>
    %c0_25 = arith.constant 0 : index
    %c0_26 = arith.constant 0 : index
    %72 = vector.load %arg6[%c0_25, %c0_26] : memref<16x128xf32, #tpu.memory_space<vmem>>, vector<16x128xf32>
    tpu.vector_store %arg6[%c0_25, %c0_26], %71 {strides = array<i32>} : memref<16x128xf32, #tpu.memory_space<vmem>>, vector<16x128xf32>,
    %c0_i32_27 = arith.constant 0 : i32
    %73 = arith.cmpi eq, %arg1, %c0_i32_27 : i32
    %74 = arith.extui %73 : i1 to i32
    %c0_i32_28 = arith.constant 0 : i32
    %75 = arith.cmpi ne, %74, %c0_i32_28 : i32
    scf.if %75 {
      %c0_29 = arith.constant 0 : index
      %c0_30 = arith.constant 0 : index
      %76 = vector.load %arg5[%c0_29, %c0_30] : memref<16x128xf32, #tpu.memory_space<vmem>>, vector<16x128xf32>
      %cst_31 = arith.constant dense<0.000000e+00> : vector<16xf32>
      %77 = vector.multi_reduction <add>, %76, %cst_31 [1] : vector<16x128xf32> to vector<16xf32>
      %78 = vector.shape_cast %77 : vector<16xf32> to vector<16x1xf32>
      %c0_32 = arith.constant 0 : index
      %c0_33 = arith.constant 0 : index
      %79 = vector.load %arg6[%c0_32, %c0_33] : memref<16x128xf32, #tpu.memory_space<vmem>>, vector<16x128xf32>
      %cst_34 = arith.constant dense<0.000000e+00> : vector<16xf32>
      %80 = vector.multi_reduction <add>, %79, %cst_34 [1] : vector<16x128xf32> to vector<16xf32>
      %81 = vector.shape_cast %80 : vector<16xf32> to vector<16x1xf32>
      %c0_35 = arith.constant 0 : index
      %c0_36 = arith.constant 0 : index
      %82 = vector.load %arg3[%c0_35, %c0_36] : memref<16x1xi32, #tpu.memory_space<vmem>>, vector<16x1xi32>
      %83 = tpu.iota {dimensions = array<i32: 0>} : vector<16x1xi32>
      %c16_i32 = arith.constant 16 : i32
      %84 = arith.muli %arg0, %c16_i32 : i32
      %85 = vector.broadcast %84 : i32 to vector<16x1xi32>
      %86 = arith.addi %83, %85 : vector<16x1xi32>
      %c20_i32 = arith.constant 20 : i32
      %87 = vector.broadcast %c20_i32 : i32 to vector<16x1xi32>
      %88 = arith.cmpi slt, %86, %87 : vector<16x1xi32>
      %c1_i32_37 = arith.constant 1 : i32
      %89 = vector.broadcast %c1_i32_37 : i32 to vector<16x1xi32>
      %90 = arith.cmpi ne, %82, %89 : vector<16x1xi32>
      %91 = arith.andi %88, %90 : vector<16x1xi1>
      %c1_i32_38 = arith.constant 1 : i32
      %92 = vector.broadcast %c1_i32_38 : i32 to vector<16x1xi32>
      %93 = arith.cmpi eq, %82, %92 : vector<16x1xi32>
      %cst_39 = arith.constant -0.921784222 : f32
      %cst_40 = arith.constant -0.919625044 : f32
      %94 = vector.broadcast %cst_39 : f32 to vector<16x1xf32>
      %95 = vector.broadcast %cst_40 : f32 to vector<16x1xf32>
      %96 = arith.select %93, %94, %95 : vector<16x1xi1>, vector<16x1xf32>
      %cst_41 = arith.constant -0.899999976 : f32
      %cst_42 = arith.constant -0.899738192 : f32
      %97 = vector.broadcast %cst_41 : f32 to vector<16x1xf32>
      %98 = vector.broadcast %cst_42 : f32 to vector<16x1xf32>
      %99 = arith.select %93, %97, %98 : vector<16x1xi1>, vector<16x1xf32>
      %cst_43 = arith.constant 2.61780107E-4 : f32
      %100 = vector.broadcast %cst_43 : f32 to vector<16x1xf32>
      %101 = arith.mulf %100, %78 : vector<16x1xf32>
      %102 = arith.subf %96, %101 : vector<16x1xf32>
      %103 = arith.mulf %99, %81 : vector<16x1xf32>
      %104 = arith.addf %102, %103 : vector<16x1xf32>
      %cst_44 = arith.constant 0.000000e+00 : f32
      %105 = vector.broadcast %cst_44 : f32 to vector<16x1xf32>
      %106 = arith.select %91, %104, %105 : vector<16x1xi1>, vector<16x1xf32>
      %107 = vector.shape_cast %106 : vector<16x1xf32> to vector<1x16x1xf32>
      %cst_45 = arith.constant dense<0.000000e+00> : vector<1xf32>
      %108 = vector.multi_reduction <add>, %107, %cst_45 [1, 2] : vector<1x16x1xf32> to vector<1xf32>
      %109 = vector.shape_cast %108 : vector<1xf32> to vector<1x1x1xf32>
      %110 = vector.extract %109[0, 0, 0] : f32 from vector<1x1x1xf32>
      %111 = vector.broadcast %110 : f32 to vector<1x1x1xf32>
      %c0_46 = arith.constant 0 : index
      %c0_47 = arith.constant 0 : index
      %c0_48 = arith.constant 0 : index
      %112 = vector.load %arg4[%c0_46, %c0_47, %c0_48] : memref<1x1x1xf32, #tpu.memory_space<vmem>>, vector<1x1x1xf32>
      tpu.vector_store %arg4[%c0_46, %c0_47, %c0_48], %111 {strides = array<i32>} : memref<1x1x1xf32, #tpu.memory_space<vmem>>, vector<1x1x1xf32>,
    } else {
    }
    return
  }
  func.func @transform_0(%arg0: i32, %arg1: i32) -> (i32, i32) {
    %c0_i32 = arith.constant 0 : i32
    return %arg0, %arg1 : i32, i32
  }
  func.func @transform_1(%arg0: i32, %arg1: i32) -> (i32, i32) {
    %c0_i32 = arith.constant 0 : i32
    %c0_i32_0 = arith.constant 0 : i32
    return %arg0, %c0_i32 : i32, i32
  }
  func.func @transform_2(%arg0: i32, %arg1: i32) -> (i32, i32, i32) {
    %c0_i32 = arith.constant 0 : i32
    %c0_i32_0 = arith.constant 0 : i32
    %c0_i32_1 = arith.constant 0 : i32
    return %arg0, %c0_i32, %c0_i32_0 : i32, i32, i32
  }
}

</mosaic_0001>

<llo_original>
// kernel: tpu_custom_call.1
$region0: #{tpu_custom_call.1}
  #allocation0 [shape = 'u32[]', space=smem, size = 0x4, offset = 0x4, fixed_abs, tag = 'smem constant byte address 0x4 - core index']
  #allocation1 [shape = 'u32[144,128]{1,0:T(1,128)}', space=vmem, size = 0x12000, scoped, tag = 'internal scratch']
  #allocation2 [shape = 'f32[16,128]{1,0:T(8,128)}', space=vmem, size = 0x2000, scoped, tag = 'scratch operand']
  #allocation3 [shape = 'f32[16,128]{1,0:T(8,128)}', space=vmem, size = 0x2000, scoped, tag = 'scratch operand']
  %s0 = inlined_call_operand.hbm [shape: f32[20,384], index: 0, kind: input, shape index: {}]
  %s1 = inlined_call_operand.vmem [shape: s32[20,1], index: 1, kind: input, shape index: {}]
  %s2 = inlined_call_operand.vmem [shape: f32[2,1,1], index: 2, kind: output, shape index: {}]
  %s3 = sld [smem:[#allocation0]]
  $region53: #{tpu_custom_call.1} parent=0
    _
  %s5 = ssub.s32 1, %s3
  %s6 = scalar_select 0, %s5, %s3
  $region1: #{tpu_custom_call.1} parent=0
    #allocation4 [shape = 'u8[49152]{0}', space=vmem, size = 0xc000, scoped, tag = 'input window, operand 0']
    #allocation5 [shape = 's32[2]{0}', space=sflag, size = 0x8, scoped, tag = 'scoped memory for tpu_custom_call.1']
    %7 = vsyncpa [#allocation5], 0
    %s8 = scalar_lea.sflag [#allocation5], 1
    %9 = vsyncpa %s8, 0
    loop: start=0, step=1, limit=4
    $region2: #{tpu_custom_call.1} parent=1 // loop_pre_header
      _
    $region3: #{tpu_custom_call.1} parent=1 // loop_header
      %s11 = sphi 0, %s15
      %p12 = scmp.ge.s32.totalorder %s11, 4
      %s18 = sphi 0, %s30
      %s19 = sphi 0, %s26
      %s20 = sphi 0, %s18
      %s21 = sphi 0, %s19
      %s22 = sphi 0, %s20
      %s23 = sphi 0, %s21
      %s35 = sphi 0, %s37
      %s38 = sphi 0, %s35
      %s39 = sphi 0, %s38
      %s55 = sphi 0, %s39
      %s61 = sphi 0, %s63
      %s64 = sphi 0, %s61
      %s65 = sphi 0, %s64
      %s81 = sphi 0, %s65
      %s87 = sphi 0, %s89
      %s90 = sphi 0, %s87
      %s91 = sphi 0, %s90
      %s107 = sphi 0, %s91
    $region4: #{tpu_custom_call.1} parent=1 // loop_header_branch
      %14 = sbr.rel (%p12) target = $region8
    $region5: #{tpu_custom_call.1} parent=1 // loop_body
      %s16 = ssub.s32 %s11, 1
      %s17 = ssub.s32 %s11, 2
      %s24 = sadd.s32 1, %s19
      %p25 = scmp.ge.s32.totalorder %s24, 1
      %s26 = scalar_select %p25, 0, %s24
      %s27 = sadd.s32 1, %s18
      %s28 = scalar_select %p25, %s27, %s18
      %p29 = scmp.ge.s32.totalorder %s28, 2
      %s30 = scalar_select %p29, 0, %s28
      %s31 = ssub.s32 %s18, %s30
      %s32 = ssub.s32 %s19, %s26
      %s33 = sor.u32 %s31, %s32
      %p34 = scmp.eq.s32.totalorder %s33, 0
      %s36 = sadd.s32 %s35, 1
      %s37 = scalar_select %p34, %s35, %s36
      %p40 = pneg %p34
      %p41 = scmp.eq.s32.totalorder %s11, 1
      %p42 = por %p40, %p41
      %p43 = scmp.ne.s32.totalorder %s35, %s38
      %p44 = scmp.eq.s32.totalorder %s11, 0
      %p45 = por %p43, %p44
      %p46 = scmp.ne.s32.totalorder %s35, %s38
      %p47 = scmp.eq.s32.totalorder %s16, 1
      %p48 = por %p46, %p47
      %p49 = scmp.ne.s32.totalorder %s38, %s39
      %p50 = scmp.eq.s32.totalorder %s16, 0
      %p51 = por %p49, %p50
      %p52 = scmp.ne.s32.totalorder %s38, %s39
      %p53 = scmp.eq.s32.totalorder %s17, 1
      %p54 = por %p52, %p53
      %p56 = scmp.ne.s32.totalorder %s39, %s55
      %p57 = scmp.eq.s32.totalorder %s17, 0
      %p58 = por %p56, %p57
      %s59 = ssub.s32 %s18, %s30
      %p60 = scmp.eq.s32.totalorder %s59, 0
      %s62 = sadd.s32 %s61, 1
      %s63 = scalar_select %p60, %s61, %s62
      %p66 = pneg %p60
      %p67 = scmp.eq.s32.totalorder %s11, 1
      %p68 = por %p66, %p67
      %p69 = scmp.ne.s32.totalorder %s61, %s64
      %p70 = scmp.eq.s32.totalorder %s11, 0
      %p71 = por %p69, %p70
      %p72 = scmp.ne.s32.totalorder %s61, %s64
      %p73 = scmp.eq.s32.totalorder %s16, 1
      %p74 = por %p72, %p73
      %p75 = scmp.ne.s32.totalorder %s64, %s65
      %p76 = scmp.eq.s32.totalorder %s16, 0
      %p77 = por %p75, %p76
      %p78 = scmp.ne.s32.totalorder %s64, %s65
      %p79 = scmp.eq.s32.totalorder %s17, 1
      %p80 = por %p78, %p79
      %p82 = scmp.ne.s32.totalorder %s65, %s81
      %p83 = scmp.eq.s32.totalorder %s17, 0
      %p84 = por %p82, %p83
      %s85 = ssub.s32 %s18, %s30
      %p86 = scmp.eq.s32.totalorder %s85, 0
      %s88 = sadd.s32 %s87, 1
      %s89 = scalar_select %p86, %s87, %s88
      %p92 = pneg %p86
      %p93 = scmp.eq.s32.totalorder %s11, 1
      %p94 = por %p92, %p93
      %p95 = scmp.ne.s32.totalorder %s87, %s90
      %p96 = scmp.eq.s32.totalorder %s11, 0
      %p97 = por %p95, %p96
      %p98 = scmp.ne.s32.totalorder %s87, %s90
      %p99 = scmp.eq.s32.totalorder %s16, 1
      %p100 = por %p98, %p99
      %p101 = scmp.ne.s32.totalorder %s90, %s91
      %p102 = scmp.eq.s32.totalorder %s16, 0
      %p103 = por %p101, %p102
      %p104 = scmp.ne.s32.totalorder %s90, %s91
      %p105 = scmp.eq.s32.totalorder %s17, 1
      %p106 = por %p104, %p105
      %p108 = scmp.ne.s32.totalorder %s91, %s107
      %p109 = scmp.eq.s32.totalorder %s17, 0
      %p110 = por %p108, %p109
      %p111 = scmp.le.s32.totalorder 1, %s11
      %p112 = scmp.lt.s32.totalorder %s11, 3
      %p113 = pnand %p111, %p112
      %p114 = pneg %p113
      // Predicated region
      $region9: #{tpu_custom_call.1} parent=5 // pred_check
        _
      $region10: #{tpu_custom_call.1} parent=5 // pred_check_branch
        %116 = sbr.rel (%p113) target = $region12
      $region11: #{tpu_custom_call.1} parent=5 // pred_region
        %s117 = ssub.s32 %s11, 1
      $region12: #{tpu_custom_call.1} parent=5 // pred_fallthru
        _
      %p118 = scmp.lt.s32.totalorder %s11, 2
      // Predicated region
      $region13: #{tpu_custom_call.1} parent=5 // pred_check
        %p119 = pneg %p118
      $region14: #{tpu_custom_call.1} parent=5 // pred_check_branch
        %121 = sbr.rel (%p119) target = $region16
      $region15: #{tpu_custom_call.1} parent=5 // pred_region
        // Predicated region
        $region17: #{tpu_custom_call.1} parent=15 // pred_check
          %p122 = pneg %p45
        $region18: #{tpu_custom_call.1} parent=15 // pred_check_branch
          %124 = sbr.rel (%p122) target = $region20
        $region19: #{tpu_custom_call.1} parent=15 // pred_region
          %s125 = sand.u32 %s35, 1
          %s126 = scalar_lea.sflag [#allocation5], %s125
          %s127 = sand.u32 %s35, 1
          %s128 = smul.addr %s127, 48
          %s129 = scalar_lea.vmem [#allocation4], %s128
          %s130 = smul.u32 2, %s18
          %s131 = smul.u32 3, %s19
          %s132 = ssub.s32 3, %s130
          %p133 = scmp.lt.s32.totalorder %s132, 2
          %s134 = scalar_select %p133, %s132, 2
          %s135 = smul.u32 128, %s134
          %s136 = smul.u32 %s135, 3
          %s138 = ssub.s32 768, %s136
          %139 = vsyncadd %s126, %s138
          %p140 = scmp.ne.s32.totalorder 0, %s136
          %s141 = smul.addr %s130, 3
          %s142 = sadd.s32 %s131, %s141
          %s143 = smul.addr %s142, 128
          %s144 = scalar_lea.hbm %s0, %s143
          %s145 = smul.u32 24, %s134
          %s146 = sshll.u32 %s129, 4
          %s147 = int_to_ptr.vmem [resolvable:$true] %s146
          %s148 = sshll.u32 %s145, 4
          %152 = dma.hbm_to_vmem [thread:$0]  (%p140), %s144, %s148, %s147, %s126, 384, 384, 24
        $region20: #{tpu_custom_call.1} parent=15 // pred_fallthru
          _
        // Predicated region
        $region21: #{tpu_custom_call.1} parent=15 // pred_check
          %p153 = pneg %p71
        $region22: #{tpu_custom_call.1} parent=15 // pred_check_branch
          %155 = sbr.rel (%p153) target = $region24
        $region23: #{tpu_custom_call.1} parent=15 // pred_region
          %s156 = smul.u32 2, %s18
          %s157 = ssub.s32 3, %s156
          %p158 = scmp.lt.s32.totalorder %s157, 2
          %s159 = scalar_select %p158, %s157, 2
          %s160 = smul.u32 128, %s159
          %p161 = scmp.lt.s32.totalorder %s156, 2
          %s162 = scalar_select %p161, %s156, 2
          %s163 = smul.addr %s162, 8
          %s164 = scalar_lea.vmem %s1, %s163
          %s165 = smul.u32 2, %s18
          %s166 = ssub.s32 3, %s165
          %p167 = scmp.lt.s32.totalorder %s166, 2
          %s168 = scalar_select %p167, %s166, 2
          %s169 = smul.u32 128, %s168
        $region24: #{tpu_custom_call.1} parent=15 // pred_fallthru
          _
      $region16: #{tpu_custom_call.1} parent=5 // pred_fallthru
        _
      %p170 = scmp.le.s32.totalorder 1, %s11
      %p171 = scmp.lt.s32.totalorder %s11, 3
      %p172 = pnand %p170, %p171
      %p173 = pneg %p172
      // Predicated region
      $region25: #{tpu_custom_call.1} parent=5 // pred_check
        _
      $region26: #{tpu_custom_call.1} parent=5 // pred_check_branch
        %175 = sbr.rel (%p172) target = $region28
      $region27: #{tpu_custom_call.1} parent=5 // pred_region
        %s176 = ssub.s32 %s11, 1
        %s177 = sand.u32 %s38, 1
        %s178 = scalar_lea.sflag [#allocation5], %s177
        %s179 = sand.u32 %s38, 1
        %s180 = smul.addr %s179, 48
        %s181 = scalar_lea.vmem [#allocation4], %s180
        // Predicated region
        $region29: #{tpu_custom_call.1} parent=27 // pred_check
          %p182 = pneg %p51
        $region30: #{tpu_custom_call.1} parent=27 // pred_check_branch
          %184 = sbr.rel (%p182) target = $region32
        $region31: #{tpu_custom_call.1} parent=27 // pred_region
          %185 = dma.done %s178, 768
        $region32: #{tpu_custom_call.1} parent=27 // pred_fallthru
          _
        %s186 = sand.u32 %s38, 1
        %s187 = scalar_lea.sflag [#allocation5], %s186
        %s188 = sand.u32 %s38, 1
        %s189 = smul.addr %s188, 48
        %s190 = scalar_lea.vmem [#allocation4], %s189
        %p191 = pneg %p51
        %p192 = pneg %p48
        %s193 = smul.u32 2, %s20
        %s194 = ssub.s32 3, %s193
        %p195 = scmp.lt.s32.totalorder %s194, 2
        %s196 = scalar_select %p195, %s194, 2
        %s197 = smul.u32 128, %s196
        %p198 = scmp.lt.s32.totalorder %s193, 2
        %s199 = scalar_select %p198, %s193, 2
        %s200 = smul.addr %s199, 8
        %s201 = scalar_lea.vmem %s1, %s200
        %p202 = pneg %p77
        %p203 = pneg %p74
        %p204 = pneg %p103
        %p205 = pneg %p100
        %p206 = scmp.lt.s32.totalorder %s20, 1
        %s207 = scalar_select %p206, %s20, 1
        %s208 = scalar_lea.vmem %s2, %s207
        %s209 = smul.u32 2, %s20
        %s210 = smul.u32 3, %s21
        %s211 = ssub.s32 3, %s209
        %p212 = scmp.lt.s32.totalorder %s211, 2
        %s213 = scalar_select %p212, %s211, 2
        %s214 = smul.u32 128, %s213
        %s215 = smul.u32 %s214, 3
        %s216 = smul.u32 2, %s20
        %s217 = ssub.s32 3, %s216
        %p218 = scmp.lt.s32.totalorder %s217, 2
        %s219 = scalar_select %p218, %s217, 2
        %s220 = smul.u32 128, %s219
        %p221 = scmp.lt.s32.totalorder %s216, 2
        %s222 = scalar_select %p221, %s216, 2
        %s223 = smul.addr %s222, 8
        %s224 = scalar_lea.vmem %s1, %s223
        %s225 = smul.u32 2, %s20
        %s226 = ssub.s32 3, %s225
        %p227 = scmp.lt.s32.totalorder %s226, 2
        %s228 = scalar_select %p227, %s226, 2
        %s229 = smul.u32 128, %s228
        %p230 = scmp.lt.s32.totalorder %s20, 1
        %s231 = scalar_select %p230, %s20, 1
        %s232 = scalar_lea.vmem %s2, %s231
        %p233 = scmp.eq.s32.totalorder %s21, 0
        // Predicated region
        $region33: #{tpu_custom_call.1} parent=27 // pred_check
          %p234 = pneg %p233
        $region34: #{tpu_custom_call.1} parent=27 // pred_check_branch
          %236 = sbr.rel (%p234) target = $region36
        $region35: #{tpu_custom_call.1} parent=27 // pred_region
          %237 = vst [vmem:[#allocation2] sm:$0xff] 0.0
          %238 = vst [vmem:[#allocation2 + $0x8] sm:$0xff] 0.0
          %239 = vst [vmem:[#allocation3] sm:$0xff] 0.0
          %240 = vst [vmem:[#allocation3 + $0x8] sm:$0xff] 0.0
        $region36: #{tpu_custom_call.1} parent=27 // pred_fallthru
          _
        %v241 = vld [vmem:[%s224] sm:$0xff]
        %v242 = vld [vmem:[%s224 + $0x8] sm:$0xff]
        %243 = vset.pattern.permute.xlu0 0
        %244 = vperm.xlu0 %243, %v241
        %v245 = vpop.permute.xlu0 %244
        %246 = vset.pattern.permute.xlu0 0
        %247 = vperm.xlu0 %246, %v242
        %v248 = vpop.permute.xlu0 %247
        %v249 = vlaneseq
        %v250 = vand.u32 %v249, 127
        %s251 = smul.u32 %s21, 384
        %v252 = vstv %s251
        %v253 = vadd.s32 %v250, %v252
        %vm254 = vcmp.lt.s32.totalorder %v253, 384
        %vm255 = vcmp.ne.s32.totalorder %v253, 1
        %vm256 = vmand %vm254, %vm255
        %v257 = vld [vmem:[%s181] sm:$0xff]
        %v258 = vld [vmem:[%s181 + $0x18] sm:$0xff]
        %vm259 = vcmp.eq.s32.totalorder %v253, %v245
        %vm260 = vcmp.eq.s32.totalorder %v253, %v248
        %v261 = vsel %vm256, 1, 0
        %vm262 = vcmp.eq.s32.totalorder %v261, 1
        %v263 = vsel %vm262, %v257, 0.0
        %v264 = vsel %vm262, %v258, 0.0
        %v265 = vadd.f32 %v263, 0.0
        %v266 = vadd.f32 %v264, 0.0
        %v267 = vsel %vm259, %v257, 0.0
        %v268 = vsel %vm260, %v258, 0.0
        %v269 = vadd.f32 %v267, 0.0
        %v270 = vadd.f32 %v268, 0.0
        %s271 = sadd.s32 %s251, 128
        %v272 = vstv %s271
        %v273 = vadd.s32 %v250, %v272
        %vm274 = vcmp.lt.s32.totalorder %v273, 384
        %vm275 = vcmp.ne.s32.totalorder %v273, 1
        %vm276 = vmand %vm274, %vm275
        %v277 = vld [vmem:[%s181 + $0x8] sm:$0xff]
        %v278 = vld [vmem:[%s181 + $0x20] sm:$0xff]
        %vm279 = vcmp.eq.s32.totalorder %v273, %v245
        %vm280 = vcmp.eq.s32.totalorder %v273, %v248
        %v281 = vsel %vm276, 1, 0
        %vm282 = vcmp.eq.s32.totalorder %v281, 1
        %v283 = vsel %vm282, %v277, 0.0
        %v284 = vsel %vm282, %v278, 0.0
        %v285 = vadd.f32 %v265, %v283
        %v286 = vadd.f32 %v266, %v284
        %v287 = vsel %vm279, %v277, 0.0
        %v288 = vsel %vm280, %v278, 0.0
        %v289 = vadd.f32 %v269, %v287
        %v290 = vadd.f32 %v270, %v288
        %s291 = sadd.s32 %s251, 256
        %v292 = vstv %s291
        %v293 = vadd.s32 %v250, %v292
        %vm294 = vcmp.lt.s32.totalorder %v293, 384
        %vm295 = vcmp.ne.s32.totalorder %v293, 1
        %vm296 = vmand %vm294, %vm295
        %v297 = vld [vmem:[%s181 + $0x10] sm:$0xff]
        %v298 = vld [vmem:[%s181 + $0x28] sm:$0xff]
        %vm299 = vcmp.eq.s32.totalorder %v293, %v245
        %vm300 = vcmp.eq.s32.totalorder %v293, %v248
        %v301 = vsel %vm296, 1, 0
        %vm302 = vcmp.eq.s32.totalorder %v301, 1
        %v303 = vsel %vm302, %v297, 0.0
        %v304 = vsel %vm302, %v298, 0.0
        %v305 = vadd.f32 %v285, %v303
        %v306 = vadd.f32 %v286, %v304
        %v307 = vsel %vm299, %v297, 0.0
        %v308 = vsel %vm300, %v298, 0.0
        %v309 = vadd.f32 %v289, %v307
        %v310 = vadd.f32 %v290, %v308
        %v311 = vld [vmem:[#allocation2] sm:$0xff]
        %v312 = vld [vmem:[#allocation2 + $0x8] sm:$0xff]
        %v313 = vadd.f32 %v311, %v305
        %v314 = vadd.f32 %v312, %v306
        %315 = vst [vmem:[#allocation2] sm:$0xff] %v313
        %316 = vst [vmem:[#allocation2 + $0x8] sm:$0xff] %v314
        %v317 = vld [vmem:[#allocation3] sm:$0xff]
        %v318 = vld [vmem:[#allocation3 + $0x8] sm:$0xff]
        %v319 = vadd.f32 %v317, %v309
        %v320 = vadd.f32 %v318, %v310
        %321 = vst [vmem:[#allocation3] sm:$0xff] %v319
        %322 = vst [vmem:[#allocation3 + $0x8] sm:$0xff] %v320
        // Predicated region
        $region37: #{tpu_custom_call.1} parent=27 // pred_check
          %p323 = pneg %p233
        $region38: #{tpu_custom_call.1} parent=27 // pred_check_branch
          %325 = sbr.rel (%p323) target = $region40
        $region39: #{tpu_custom_call.1} parent=27 // pred_region
          %v326 = vld [vmem:[#allocation2] sm:$0xff]
          %v327 = vld [vmem:[#allocation2 + $0x8] sm:$0xff]
          %328 = vadd.xlane.f32.xlu0 %v326
          %v329 = vpop.xlane.xlu0 %328
          %330 = vadd.xlane.f32.xlu0 %v327
          %v331 = vpop.xlane.xlu0 %330
          %v332 = vld [vmem:[#allocation3] sm:$0xff]
          %v333 = vld [vmem:[#allocation3 + $0x8] sm:$0xff]
          %334 = vadd.xlane.f32.xlu0 %v332
          %v335 = vpop.xlane.xlu0 %334
          %336 = vadd.xlane.f32.xlu0 %v333
          %v337 = vpop.xlane.xlu0 %336
          %v338 = vld [vmem:[%s224] sm:$0xff]
          %v339 = vld [vmem:[%s224 + $0x8] sm:$0xff]
          %v340 = vlaneseq
          %v341 = vshrl.u32 %v340, 7
          %v342 = vadd.s32 %v341, 8
          %s343 = smul.u32 %s20, 16
          %v344 = vstv %s343
          %v345 = vadd.s32 %v341, %v344
          %v346 = vadd.s32 %v342, %v344
          %vm347 = vcmp.lt.s32.totalorder %v345, 20
          %vm348 = vcmp.lt.s32.totalorder %v346, 20
          %vm349 = vcmp.ne.s32.totalorder %v338, 1
          %vm350 = vcmp.ne.s32.totalorder %v339, 1
          %vm351 = vmand %vm347, %vm349
          %vm352 = vmand %vm348, %vm350
          %vm353 = vcmp.eq.s32.totalorder %v338, 1
          %vm354 = vcmp.eq.s32.totalorder %v339, 1
          %v355 = vsel %vm353, -0.9217842, -0.91962504
          %v356 = vsel %vm354, -0.9217842, -0.91962504
          %v357 = vsel %vm353, -0.9, -0.8997382
          %v358 = vsel %vm354, -0.9, -0.8997382
          %v359 = vmul.f32 %v329, 0.0002617801
          %v360 = vmul.f32 %v331, 0.0002617801
          %v361 = vsub.f32 %v355, %v359
          %v362 = vsub.f32 %v356, %v360
          %v363 = vmul.f32 %v357, %v335
          %v364 = vmul.f32 %v358, %v337
          %v365 = vadd.f32 %v361, %v363
          %v366 = vadd.f32 %v362, %v364
          %v367 = vsel %vm351, %v365, 0.0
          %v368 = vsel %vm352, %v366, 0.0
          %vm369 = vcmask 7168
          %v370 = vsel %vm369, %v367, 0.0
          %v371 = vsel %vm369, %v368, 0.0
          %v372 = vadd.f32 %v370, %v371
          %373 = vadd.xlane.f32.xlu0 %v372
          %v374 = vpop.xlane.xlu0 %373
          %v375 = vrot.slane %v374, 4
          %v376 = vadd.f32 %v374, %v375
          %v377 = vrot.slane %v376, 2
          %v378 = vadd.f32 %v376, %v377
          %v379 = vrot.slane %v378, 1
          %v380 = vadd.f32 %v378, %v379
          %s381 = vtos %v380
          %v382 = vstv %s381
          %vm383 = vcmask 0
          %384 = vst.msk [vmem:[%s232] sm:$0x1] %vm383, %v382
        $region40: #{tpu_custom_call.1} parent=27 // pred_fallthru
          _
        %p385 = scmp.lt.s32.totalorder %s20, 1
        %s386 = scalar_select %p385, %s20, 1
        %s387 = scalar_lea.vmem %s2, %s386
        // Predicated region
        $region41: #{tpu_custom_call.1} parent=27 // pred_check
          %p388 = pneg %p100
        $region42: #{tpu_custom_call.1} parent=27 // pred_check_branch
          %390 = sbr.rel (%p388) target = $region44
        $region43: #{tpu_custom_call.1} parent=27 // pred_region
          _
        $region44: #{tpu_custom_call.1} parent=27 // pred_fallthru
          _
      $region28: #{tpu_custom_call.1} parent=5 // pred_fallthru
        _
      %p391 = scmp.le.s32.totalorder 2, %s11
      // Predicated region
      $region45: #{tpu_custom_call.1} parent=5 // pred_check
        %p392 = pneg %p391
      $region46: #{tpu_custom_call.1} parent=5 // pred_check_branch
        %394 = sbr.rel (%p392) target = $region48
      $region47: #{tpu_custom_call.1} parent=5 // pred_region
        %s395 = ssub.s32 %s11, 2
        // Predicated region
        $region49: #{tpu_custom_call.1} parent=47 // pred_check
          %p396 = pneg %p106
        $region50: #{tpu_custom_call.1} parent=47 // pred_check_branch
          %398 = sbr.rel (%p396) target = $region52
        $region51: #{tpu_custom_call.1} parent=47 // pred_region
          %p399 = scmp.lt.s32.totalorder %s22, 1
          %s400 = scalar_select %p399, %s22, 1
          %s401 = scalar_lea.vmem %s2, %s400
        $region52: #{tpu_custom_call.1} parent=47 // pred_fallthru
          _
      $region48: #{tpu_custom_call.1} parent=5 // pred_fallthru
        _
    $region6: #{tpu_custom_call.1} parent=1 // loop_footer
      %s15 = sadd.s32 1, %s11
    $region7: #{tpu_custom_call.1} parent=1 // loop_footer_branch
      %10 = sbr.rel target = $region3
    $region8: #{tpu_custom_call.1} parent=1 // loop_exit
      _
    %402 = vsyncpa [#allocation5], 1
    %s403 = scalar_lea.sflag [#allocation5], 1
    %404 = vsyncpa %s403, 1

</llo_original>
